<compile_context>
chip_gen: v6e
topology: v6e:2x2x1
jax: 0.10.0
libtpu: 0.0.40
codegen_flags: <defaults>
</compile_context>

<pallas_src>
import functools
import numpy as np
import jax
import jax.numpy as jnp
from jax.experimental import pallas as pl
from jax.experimental.pallas import tpu as pltpu

_LANE = 128


def _round_up(n, m):
    return (n + m - 1) // m * m


def _pad_to(arr, shape):
    pads = [(0, t - s) for s, t in zip(arr.shape, shape)]
    if all(p == (0, 0) for p in pads):
        return arr
    return jnp.pad(arr, pads)


def _vmem_capacity_bytes():
    """Best-effort query of physical VMEM; conservative (v7x) fallback."""
    try:
        info = pltpu.get_tpu_info()
        cap = getattr(info, "vmem_capacity_bytes", None)
        if cap:
            return int(cap)
    except Exception:
        pass
    return 64 << 20


def _estimate_vmem_bytes(bt, s, dp, dkp, dvp, io_bytes, q_rows):
    """Conservative per-grid-step VMEM working-set estimate (incl. 2x buffering)."""
    m = bt * s
    n_qkv = 2 * dkp + dvp
    total = 2 * 2 * bt * s * dp * io_bytes               # x + out tiles, double-buffered
    total += 2 * (dp * n_qkv + dvp * dp) * 2             # bf16 weights (2 buffers)
    total += 2 * (n_qkv + 3 * dp) * 4                    # biases / gamma / beta (f32)
    total += m * dp * 4                                  # f32 copy of x (residual path)
    total += m * n_qkv * (4 + 2)                         # qkv f32 + bf16 copies
    total += 3 * bt * q_rows * s * 4                     # scores / exp / probs (f32)
    total += m * dvp * (4 + 2)                           # ctx f32 + bf16
    total += 2 * m * dp * 4                              # y, normalized output
    return total


def _self_attention_kernel(x_ref, wqkv_ref, bqkv_ref, wfc_ref, bfc_ref,
                           gamma_ref, beta_ref, o_ref,
                           *, d_model, dkp, dvp, eps, q_tile):
    bt, s, dp = x_ref.shape
    m = bt * s

    xm_in = x_ref[...].reshape(m, dp)                    # lane-dense slab (bf16 I/O)
    xm_bf = xm_in.astype(jnp.bfloat16)                   # MXU operand dtype
    xm = xm_in.astype(jnp.float32)                       # f32 residual / LN path

    # --- fused q/k/v projection: one (M, Dp) @ (Dp, 2*dkp+dvp) matmul ---
    # 1/sqrt(d_k) is already folded into the q columns of wqkv / bqkv.
    qkv = jnp.dot(xm_bf, wqkv_ref[...],
                  preferred_element_type=jnp.float32) + bqkv_ref[...]
    qb = qkv[:, :dkp].reshape(bt, s, dkp).astype(jnp.bfloat16)
    kb = qkv[:, dkp:2 * dkp].reshape(bt, s, dkp).astype(jnp.bfloat16)
    vb = qkv[:, 2 * dkp:2 * dkp + dvp].reshape(bt, s, dvp).astype(jnp.bfloat16)

    # --- scaled dot-product attention; contract last dims (no explicit k.T) ---
    def _attend(q_blk):
        sc = jnp.einsum("bqd,bkd->bqk", q_blk, kb,
                        preferred_element_type=jnp.float32)
        sc = sc - jnp.max(sc, axis=-1, keepdims=True)
        e = jnp.exp(sc)
        p = e * pl.reciprocal(jnp.sum(e, axis=-1, keepdims=True), approx=True)
        return jnp.einsum("bqk,bkd->bqd", p.astype(jnp.bfloat16), vb,
                          preferred_element_type=jnp.float32)

    if q_tile is not None and s > q_tile and s % q_tile == 0:
        # Query-tiled path: only a (bt, q_tile, S) score block is live at a time.
        # TODO(synk): for K/V that no longer fit VMEM, extend this to a true
        #             online-softmax accumulation over key tiles.
        ctx = jnp.concatenate(
            [_attend(qb[:, t * q_tile:(t + 1) * q_tile, :])
             for t in range(s // q_tile)], axis=1)
    else:
        ctx = _attend(qb)                                # (bt, S, dvp)

    # --- fc back to d_model, residual add (f32) ---
    ctx2 = ctx.reshape(m, dvp).astype(jnp.bfloat16)
    y = jnp.dot(ctx2, wfc_ref[...],
                preferred_element_type=jnp.float32) + bfc_ref[...]
    y = y + xm

    # --- LayerNorm over the real d_model columns (exact two-pass variance).
    # Padded columns of y are exactly zero (zero-padded weights/bias/residual),
    # so their centered value is -mean; subtract their contribution exactly.
    inv_d = 1.0 / d_model
    mean = jnp.sum(y, axis=-1, keepdims=True) * inv_d
    yc = y - mean
    ssq = jnp.sum(yc * yc, axis=-1, keepdims=True)
    var = (ssq - float(dp - d_model) * mean * mean) * inv_d
    y_norm = yc * jax.lax.rsqrt(var + eps)
    out = y_norm * gamma_ref[...] + beta_ref[...]        # padded gamma/beta are 0

    o_ref[...] = out.reshape(bt, s, dp).astype(o_ref.dtype)


def self_attention_forward(x, params, d_k, *, io_dtype=jnp.bfloat16,
                           target_rows=256):
    """x: (B, S, d_model). params: dict of weights/biases. Returns io_dtype output."""
    B, S, D = x.shape
    dk = params["wq"].shape[1]
    dv = params["wv"].shape[1]

    Dp = _round_up(D, _LANE)
    dkp = _round_up(dk, _LANE)
    dvp = _round_up(dv, _LANE)

    inv_temperature = float(1.0 / np.sqrt(d_k))

    # Fold 1/sqrt(d_k) into wq/bq, pad every feature dim to the 128-lane width,
    # and fuse q/k/v into a single wide bf16 weight (and f32 bias).
    wq = _pad_to(params["wq"] * inv_temperature, (Dp, dkp))
    wk = _pad_to(params["wk"], (Dp, dkp))
    wv = _pad_to(params["wv"], (Dp, dvp))
    wqkv = jnp.concatenate([wq, wk, wv], axis=1).astype(jnp.bfloat16)
    bq = _pad_to(params["bq"] * inv_temperature, (1, dkp))
    bk = _pad_to(params["bk"], (1, dkp))
    bv = _pad_to(params["bv"], (1, dvp))
    bqkv = jnp.concatenate([bq, bk, bv], axis=1).astype(jnp.float32)
    wfc = _pad_to(params["wfc"], (dvp, Dp)).astype(jnp.bfloat16)
    bfc = _pad_to(params["bfc"], (1, Dp)).astype(jnp.float32)
    gamma = _pad_to(params["gamma"], (1, Dp)).astype(jnp.float32)
    beta = _pad_to(params["beta"], (1, Dp)).astype(jnp.float32)

    # bf16 activation I/O; fast path skips the pad pass when already lane-aligned.
    x_in = x if x.dtype == io_dtype else x.astype(io_dtype)
    xp = x_in if Dp == D else _pad_to(x_in, (B, S, Dp))
    io_bytes = jnp.dtype(io_dtype).itemsize

    # Generation-aware budgets.
    vmem_cap = _vmem_capacity_bytes()
    small_vmem = vmem_cap <= (64 << 20)                  # v7x-class
    budget = (20 << 20) if small_vmem else (48 << 20)
    flash_threshold = 256 if small_vmem else 512
    q_tile = 256 if (S > flash_threshold and S % 256 == 0) else None
    q_rows = q_tile if q_tile is not None else S

    # Batch tile: largest divisor of B whose full working set fits the budget,
    # while guaranteeing >= 2 grid steps when B allows (megacore + pipelining).
    min_steps = 2 if B >= 2 else 1
    bt = 1
    for cand in range(1, B + 1):
        if B % cand != 0:
            continue
        if B // cand < min_steps:
            break
        if _estimate_vmem_bytes(cand, S, Dp, dkp, dvp, io_bytes, q_rows) > budget:
            break
        bt = cand
        if cand * S >= target_rows:
            break
    grid = (B // bt,)

    est = _estimate_vmem_bytes(bt, S, Dp, dkp, dvp, io_bytes, q_rows)
    vmem_limit = int(min(0.75 * vmem_cap, max(32 << 20, 2 * est)))

    kernel = functools.partial(
        _self_attention_kernel,
        d_model=D, dkp=dkp, dvp=dvp, eps=1e-5, q_tile=q_tile,
    )

    full2d = lambda a: pl.BlockSpec(a.shape, lambda b: (0, 0))

    out = pl.pallas_call(
        kernel,
        out_shape=jax.ShapeDtypeStruct((B, S, Dp), io_dtype),
        grid_spec=pltpu.PrefetchScalarGridSpec(
            num_scalar_prefetch=0,
            grid=grid,
            in_specs=[
                pl.BlockSpec((bt, S, Dp), lambda b: (b, 0, 0)),   # enc_input tile
                full2d(wqkv), full2d(bqkv),
                full2d(wfc), full2d(bfc),
                full2d(gamma), full2d(beta),
            ],
            out_specs=pl.BlockSpec((bt, S, Dp), lambda b: (b, 0, 0)),
        ),
        compiler_params=pltpu.CompilerParams(
            dimension_semantics=("parallel",),
            vmem_limit_bytes=vmem_limit),
    )(xp, wqkv, bqkv, wfc, bfc, gamma, beta)

    if Dp != D:
        out = out[:, :, :D]
    return out


def init_params(key, d_model, d_k, d_v):
    """Deterministic synthetic parameter init mirroring the module's shapes/stds."""
    ks = jax.random.split(key, 8)
    std_qk = np.sqrt(2.0 / (d_model + d_k))
    std_v = np.sqrt(2.0 / (d_model + d_v))
    std_fc = np.sqrt(2.0 / d_model)  # kaiming_normal fan_out, relu gain
    params = {
        # stored (in, out): equivalent to torch weight (out, in) transposed
        "wq": jax.random.normal(ks[0], (d_model, d_k), jnp.float32) * std_qk,
        "bq": jax.random.normal(ks[1], (1, d_k), jnp.float32) * 0.01,
        "wk": jax.random.normal(ks[2], (d_model, d_k), jnp.float32) * std_qk,
        "bk": jax.random.normal(ks[3], (1, d_k), jnp.float32) * 0.01,
        "wv": jax.random.normal(ks[4], (d_model, d_v), jnp.float32) * std_v,
        "bv": jax.random.normal(ks[5], (1, d_v), jnp.float32) * 0.01,
        "wfc": jax.random.normal(ks[6], (d_v, d_model), jnp.float32) * std_fc,
        "bfc": jax.random.normal(ks[7], (1, d_model), jnp.float32) * 0.01,
        "gamma": jnp.ones((1, d_model), jnp.float32),
        "beta": jnp.zeros((1, d_model), jnp.float32),
    }
    return params


def reference_forward(x, params, d_k):
    """Pure-JAX f32 reference for a sanity check."""
    q = x @ params["wq"] + params["bq"]
    k = x @ params["wk"] + params["bk"]
    v = x @ params["wv"] + params["bv"]
    attn = jnp.einsum("bqd,bkd->bqk", q, k) / np.power(d_k, 0.5)
    attn = jax.nn.softmax(attn, axis=-1)
    out = jnp.einsum("bqk,bkd->bqd", attn, v)
    out = out @ params["wfc"] + params["bfc"]
    y = out + x
    mean = jnp.mean(y, axis=-1, keepdims=True)
    var = jnp.mean((y - mean) ** 2, axis=-1, keepdims=True)
    return (y - mean) * jax.lax.rsqrt(var + 1e-5) * params["gamma"] + params["beta"]


if __name__ == "__main__":
    B, S, d_model, d_k, d_v = 2, 8, 32, 16, 16

    key = jax.random.PRNGKey(0)
    kx, kp = jax.random.split(key)
    x = jax.random.normal(kx, (B, S, d_model), jnp.float32)
    params = init_params(kp, d_model, d_k, d_v)

    out = self_attention_forward(x, params, d_k)
    out = jax.block_until_ready(out)

    ref = reference_forward(x, params, d_k)
    # bf16 activation I/O + bf16 MXU operands + approx reciprocal -> loose tol.
    np.testing.assert_allclose(np.asarray(out, dtype=np.float32),
                               np.asarray(ref), rtol=5e-2, atol=5e-2)

    print("KERNEL_OK")
</pallas_src>

<mosaic_0001>
module attributes {stable_mosaic.version = 11 : i64} {
  func.func @_self_attention_kernel(%arg0: i32, %arg1: memref<1x8x128xbf16, #tpu.memory_space<vmem>>, %arg2: memref<128x384xbf16, #tpu.memory_space<vmem>>, %arg3: memref<1x384xf32, #tpu.memory_space<vmem>>, %arg4: memref<128x128xbf16, #tpu.memory_space<vmem>>, %arg5: memref<1x128xf32, #tpu.memory_space<vmem>>, %arg6: memref<1x128xf32, #tpu.memory_space<vmem>>, %arg7: memref<1x128xf32, #tpu.memory_space<vmem>>, %arg8: memref<1x8x128xbf16, #tpu.memory_space<vmem>>) attributes {dimension_semantics = [#tpu.dimension_semantics<parallel>], iteration_bounds = array<i64: 2>, scalar_prefetch = 0 : i64, scratch_operands = 0 : i64, tpu.core_type = #tpu.core_type<tc>, window_params = [{transform_indices = @transform_0, window_bounds = array<i64: 1, 8, 128>}, {pipeline_mode = #tpu.pipeline_mode<synchronous>, transform_indices = @transform_1, window_bounds = array<i64: 128, 384>}, {pipeline_mode = #tpu.pipeline_mode<synchronous>, transform_indices = @transform_2, window_bounds = array<i64: 1, 384>}, {pipeline_mode = #tpu.pipeline_mode<synchronous>, transform_indices = @transform_3, window_bounds = array<i64: 128, 128>}, {pipeline_mode = #tpu.pipeline_mode<synchronous>, transform_indices = @transform_4, window_bounds = array<i64: 1, 128>}, {pipeline_mode = #tpu.pipeline_mode<synchronous>, transform_indices = @transform_5, window_bounds = array<i64: 1, 128>}, {pipeline_mode = #tpu.pipeline_mode<synchronous>, transform_indices = @transform_6, window_bounds = array<i64: 1, 128>}, {transform_indices = @transform_7, window_bounds = array<i64: 1, 8, 128>}]} {
    %c0 = arith.constant 0 : index
    %c0_0 = arith.constant 0 : index
    %c0_1 = arith.constant 0 : index
    %0 = vector.load %arg1[%c0, %c0_0, %c0_1] : memref<1x8x128xbf16, #tpu.memory_space<vmem>>, vector<1x8x128xbf16>
    %1 = vector.shape_cast %0 : vector<1x8x128xbf16> to vector<8x128xbf16>
    %2 = arith.extf %1 : vector<8x128xbf16> to vector<8x128xf32>
    %c0_2 = arith.constant 0 : index
    %c0_3 = arith.constant 0 : index
    %3 = vector.load %arg2[%c0_2, %c0_3] : memref<128x384xbf16, #tpu.memory_space<vmem>>, vector<128x384xbf16>
    %cst = arith.constant dense<0.000000e+00> : vector<8x384xf32>
    %4 = tpu.matmul %1, %3, %cst {dimension_numbers = #tpu.dot_dimension_numbers<[1], [0], [0], [1], [0, 0, 1, 1], [], []>} : vector<8x128xbf16>, vector<128x384xbf16>, vector<8x384xf32> -> vector<8x384xf32>
    %c0_4 = arith.constant 0 : index
    %c0_5 = arith.constant 0 : index
    %5 = vector.load %arg3[%c0_4, %c0_5] : memref<1x384xf32, #tpu.memory_space<vmem>>, vector<1x384xf32>
    %6 = vector.broadcast %5 : vector<1x384xf32> to vector<8x384xf32>
    %7 = arith.addf %4, %6 : vector<8x384xf32>
    %8 = vector.extract_strided_slice %7 {offsets = [0, 0], sizes = [8, 128], strides = [1, 1]} : vector<8x384xf32> to vector<8x128xf32>
    %9 = vector.shape_cast %8 : vector<8x128xf32> to vector<1x8x128xf32>
    %10 = arith.truncf %9 : vector<1x8x128xf32> to vector<1x8x128xbf16>
    %11 = vector.extract_strided_slice %7 {offsets = [0, 128], sizes = [8, 128], strides = [1, 1]} : vector<8x384xf32> to vector<8x128xf32>
    %12 = vector.shape_cast %11 : vector<8x128xf32> to vector<1x8x128xf32>
    %13 = arith.truncf %12 : vector<1x8x128xf32> to vector<1x8x128xbf16>
    %14 = vector.extract_strided_slice %7 {offsets = [0, 256], sizes = [8, 128], strides = [1, 1]} : vector<8x384xf32> to vector<8x128xf32>
    %15 = vector.shape_cast %14 : vector<8x128xf32> to vector<1x8x128xf32>
    %16 = arith.truncf %15 : vector<1x8x128xf32> to vector<1x8x128xbf16>
    "tpu.trace_start"() <{level = 10 : i32, message = "bqd,bkd->bqk"}> : () -> ()
    %cst_6 = arith.constant dense<0.000000e+00> : vector<1x8x8xf32>
    %17 = tpu.matmul %10, %13, %cst_6 {dimension_numbers = #tpu.dot_dimension_numbers<[2], [2], [1], [1], [0, 0, 0, 1, 1, 1], [0], [0]>} : vector<1x8x128xbf16>, vector<1x8x128xbf16>, vector<1x8x8xf32> -> vector<1x8x8xf32>
    "tpu.trace_stop"() : () -> ()
    %cst_7 = arith.constant dense<0xFF800000> : vector<1x8xf32>
    %18 = vector.multi_reduction <maximumf>, %17, %cst_7 [2] : vector<1x8x8xf32> to vector<1x8xf32>
    %19 = vector.shape_cast %18 : vector<1x8xf32> to vector<1x8x1xf32>
    %20 = vector.broadcast %19 : vector<1x8x1xf32> to vector<1x8x8xf32>
    %21 = arith.subf %17, %20 : vector<1x8x8xf32>
    %22 = math.exp %21 : vector<1x8x8xf32>
    %cst_8 = arith.constant dense<0.000000e+00> : vector<1x8xf32>
    %23 = vector.multi_reduction <add>, %22, %cst_8 [2] : vector<1x8x8xf32> to vector<1x8xf32>
    %24 = vector.shape_cast %23 : vector<1x8xf32> to vector<1x8x1xf32>
    %25 = tpu.reciprocal %24 {approx = true} : vector<1x8x1xf32> -> vector<1x8x1xf32>
    %26 = vector.broadcast %25 : vector<1x8x1xf32> to vector<1x8x8xf32>
    %27 = arith.mulf %22, %26 : vector<1x8x8xf32>
    %28 = arith.truncf %27 : vector<1x8x8xf32> to vector<1x8x8xbf16>
    "tpu.trace_start"() <{level = 10 : i32, message = "bqk,bkd->bqd"}> : () -> ()
    %cst_9 = arith.constant dense<0.000000e+00> : vector<1x8x128xf32>
    %29 = tpu.matmul %28, %16, %cst_9 {dimension_numbers = #tpu.dot_dimension_numbers<[2], [1], [1], [2], [0, 0, 0, 1, 1, 2], [0], [0]>} : vector<1x8x8xbf16>, vector<1x8x128xbf16>, vector<1x8x128xf32> -> vector<1x8x128xf32>
    "tpu.trace_stop"() : () -> ()
    %30 = vector.shape_cast %29 : vector<1x8x128xf32> to vector<8x128xf32>
    %31 = arith.truncf %30 : vector<8x128xf32> to vector<8x128xbf16>
    %c0_10 = arith.constant 0 : index
    %c0_11 = arith.constant 0 : index
    %32 = vector.load %arg4[%c0_10, %c0_11] : memref<128x128xbf16, #tpu.memory_space<vmem>>, vector<128x128xbf16>
    %cst_12 = arith.constant dense<0.000000e+00> : vector<8x128xf32>
    %33 = tpu.matmul %31, %32, %cst_12 {dimension_numbers = #tpu.dot_dimension_numbers<[1], [0], [0], [1], [0, 0, 1, 1], [], []>} : vector<8x128xbf16>, vector<128x128xbf16>, vector<8x128xf32> -> vector<8x128xf32>
    %c0_13 = arith.constant 0 : index
    %c0_14 = arith.constant 0 : index
    %34 = vector.load %arg5[%c0_13, %c0_14] : memref<1x128xf32, #tpu.memory_space<vmem>>, vector<1x128xf32>
    %35 = vector.broadcast %34 : vector<1x128xf32> to vector<8x128xf32>
    %36 = arith.addf %33, %35 : vector<8x128xf32>
    %37 = arith.addf %36, %2 : vector<8x128xf32>
    %cst_15 = arith.constant dense<0.000000e+00> : vector<8xf32>
    %38 = vector.multi_reduction <add>, %37, %cst_15 [1] : vector<8x128xf32> to vector<8xf32>
    %39 = vector.shape_cast %38 : vector<8xf32> to vector<8x1xf32>
    %cst_16 = arith.constant 3.125000e-02 : f32
    %40 = vector.broadcast %cst_16 : f32 to vector<8x1xf32>
    %41 = arith.mulf %39, %40 : vector<8x1xf32>
    %42 = vector.broadcast %41 : vector<8x1xf32> to vector<8x128xf32>
    %43 = arith.subf %37, %42 : vector<8x128xf32>
    %44 = arith.mulf %43, %43 : vector<8x128xf32>
    %cst_17 = arith.constant dense<0.000000e+00> : vector<8xf32>
    %45 = vector.multi_reduction <add>, %44, %cst_17 [1] : vector<8x128xf32> to vector<8xf32>
    %46 = vector.shape_cast %45 : vector<8xf32> to vector<8x1xf32>
    %cst_18 = arith.constant 9.600000e+01 : f32
    %47 = vector.broadcast %cst_18 : f32 to vector<8x1xf32>
    %48 = arith.mulf %47, %41 : vector<8x1xf32>
    %49 = arith.mulf %48, %41 : vector<8x1xf32>
    %50 = arith.subf %46, %49 : vector<8x1xf32>
    %cst_19 = arith.constant 3.125000e-02 : f32
    %51 = vector.broadcast %cst_19 : f32 to vector<8x1xf32>
    %52 = arith.mulf %50, %51 : vector<8x1xf32>
    %cst_20 = arith.constant 9.99999974E-6 : f32
    %53 = vector.broadcast %cst_20 : f32 to vector<8x1xf32>
    %54 = arith.addf %52, %53 : vector<8x1xf32>
    %55 = math.rsqrt %54 : vector<8x1xf32>
    %56 = vector.broadcast %55 : vector<8x1xf32> to vector<8x128xf32>
    %57 = arith.mulf %43, %56 : vector<8x128xf32>
    %c0_21 = arith.constant 0 : index
    %c0_22 = arith.constant 0 : index
    %58 = vector.load %arg6[%c0_21, %c0_22] : memref<1x128xf32, #tpu.memory_space<vmem>>, vector<1x128xf32>
    %59 = vector.broadcast %58 : vector<1x128xf32> to vector<8x128xf32>
    %60 = arith.mulf %57, %59 : vector<8x128xf32>
    %c0_23 = arith.constant 0 : index
    %c0_24 = arith.constant 0 : index
    %61 = vector.load %arg7[%c0_23, %c0_24] : memref<1x128xf32, #tpu.memory_space<vmem>>, vector<1x128xf32>
    %62 = vector.broadcast %61 : vector<1x128xf32> to vector<8x128xf32>
    %63 = arith.addf %60, %62 : vector<8x128xf32>
    %64 = vector.shape_cast %63 : vector<8x128xf32> to vector<1x8x128xf32>
    %65 = arith.truncf %64 : vector<1x8x128xf32> to vector<1x8x128xbf16>
    %c0_25 = arith.constant 0 : index
    %c0_26 = arith.constant 0 : index
    %c0_27 = arith.constant 0 : index
    %66 = vector.load %arg8[%c0_25, %c0_26, %c0_27] : memref<1x8x128xbf16, #tpu.memory_space<vmem>>, vector<1x8x128xbf16>
    tpu.vector_store %arg8[%c0_25, %c0_26, %c0_27], %65 {strides = array<i32>} : memref<1x8x128xbf16, #tpu.memory_space<vmem>>, vector<1x8x128xbf16>,
    return
  }
  func.func @transform_0(%arg0: i32) -> (i32, i32, i32) {
    %c0_i32 = arith.constant 0 : i32
    %c0_i32_0 = arith.constant 0 : i32
    %c0_i32_1 = arith.constant 0 : i32
    return %arg0, %c0_i32, %c0_i32_0 : i32, i32, i32
  }
  func.func @transform_1(%arg0: i32) -> (i32, i32) {
    %c0_i32 = arith.constant 0 : i32
    %c0_i32_0 = arith.constant 0 : i32
    %c0_i32_1 = arith.constant 0 : i32
    return %c0_i32, %c0_i32_0 : i32, i32
  }
  func.func @transform_2(%arg0: i32) -> (i32, i32) {
    %c0_i32 = arith.constant 0 : i32
    %c0_i32_0 = arith.constant 0 : i32
    %c0_i32_1 = arith.constant 0 : i32
    return %c0_i32, %c0_i32_0 : i32, i32
  }
  func.func @transform_3(%arg0: i32) -> (i32, i32) {
    %c0_i32 = arith.constant 0 : i32
    %c0_i32_0 = arith.constant 0 : i32
    %c0_i32_1 = arith.constant 0 : i32
    return %c0_i32, %c0_i32_0 : i32, i32
  }
  func.func @transform_4(%arg0: i32) -> (i32, i32) {
    %c0_i32 = arith.constant 0 : i32
    %c0_i32_0 = arith.constant 0 : i32
    %c0_i32_1 = arith.constant 0 : i32
    return %c0_i32, %c0_i32_0 : i32, i32
  }
  func.func @transform_5(%arg0: i32) -> (i32, i32) {
    %c0_i32 = arith.constant 0 : i32
    %c0_i32_0 = arith.constant 0 : i32
    %c0_i32_1 = arith.constant 0 : i32
    return %c0_i32, %c0_i32_0 : i32, i32
  }
  func.func @transform_6(%arg0: i32) -> (i32, i32) {
    %c0_i32 = arith.constant 0 : i32
    %c0_i32_0 = arith.constant 0 : i32
    %c0_i32_1 = arith.constant 0 : i32
    return %c0_i32, %c0_i32_0 : i32, i32
  }
  func.func @transform_7(%arg0: i32) -> (i32, i32, i32) {
    %c0_i32 = arith.constant 0 : i32
    %c0_i32_0 = arith.constant 0 : i32
    %c0_i32_1 = arith.constant 0 : i32
    return %arg0, %c0_i32, %c0_i32_0 : i32, i32, i32
  }
}

</mosaic_0001>

<llo_original>
// kernel: tpu_custom_call.1
$region0: #{tpu_custom_call.1}
  #allocation0 [shape = 'u32[]', space=smem, size = 0x4, offset = 0x4, fixed_abs, tag = 'smem constant byte address 0x4 - core index']
  #allocation1 [shape = 'u32[144,128]{1,0:T(1,128)}', space=vmem, size = 0x12000, scoped, tag = 'internal scratch']
  %s0 = inlined_call_operand.hbm [shape: bf16[2,8,128], index: 0, kind: input, shape index: {}]
  %s1 = inlined_call_operand.hbm [shape: bf16[128,384], index: 1, kind: input, shape index: {}]
  %s2 = inlined_call_operand.vmem [shape: f32[1,384], index: 2, kind: input, shape index: {}]
  %s3 = inlined_call_operand.hbm [shape: bf16[128,128], index: 3, kind: input, shape index: {}]
  %s4 = inlined_call_operand.vmem [shape: f32[1,128], index: 4, kind: input, shape index: {}]
  %s5 = inlined_call_operand.vmem [shape: f32[1,128], index: 5, kind: input, shape index: {}]
  %s6 = inlined_call_operand.vmem [shape: f32[1,128], index: 6, kind: input, shape index: {}]
  %s7 = inlined_call_operand.hbm [shape: bf16[2,8,128], index: 7, kind: output, shape index: {}]
  %s8 = sld [smem:[#allocation0]]
  $region73: #{tpu_custom_call.1} parent=0
    _
  %s10 = ssub.s32 1, %s8
  %s11 = scalar_select 0, %s10, %s8
  $region1: #{tpu_custom_call.1} parent=0
    #allocation2 [shape = 'u8[4096]{0}', space=vmem, size = 0x1000, scoped, tag = 'input window, operand 0']
    #allocation3 [shape = 's32[2]{0}', space=sflag, size = 0x8, scoped, tag = 'scoped memory for tpu_custom_call.1']
    #allocation4 [shape = 's32[2]{0}', space=sflag, size = 0x8, scoped, tag = 'scoped memory for tpu_custom_call.1']
    #allocation5 [shape = 'u8[98304]{0}', space=vmem, size = 0x18000, scoped, tag = 'input window, operand 1, single buffered']
    #allocation6 [shape = 's32[1]{0}', space=sflag, size = 0x4, scoped, tag = 'scoped memory for tpu_custom_call.1']
    #allocation7 [shape = 'u8[32768]{0}', space=vmem, size = 0x8000, scoped, tag = 'input window, operand 3, single buffered']
    #allocation8 [shape = 'u8[4096]{0}', space=vmem, size = 0x1000, scoped, tag = 'output window, operand 0']
    %12 = vsyncpa [#allocation3], 0
    %s13 = scalar_lea.sflag [#allocation3], 1
    %14 = vsyncpa %s13, 0
    %15 = vsyncpa [#allocation6], 0
    %16 = vsyncpa [#allocation4], 0
    %s17 = scalar_lea.sflag [#allocation4], 1
    %18 = vsyncpa %s17, 0
    loop: start=0, step=1, limit=4
    $region2: #{tpu_custom_call.1} parent=1 // loop_pre_header
      _
    $region3: #{tpu_custom_call.1} parent=1 // loop_header
      %s20 = sphi 0, %s24
      %p21 = scmp.ge.s32.totalorder %s20, 4
      %s30 = sphi 0, %s32
      %s33 = sphi 0, %s30
      %s34 = sphi 0, %s33
      %s50 = sphi 0, %s34
      %s54 = sphi 0, %s54
      %s56 = sphi 0, %s54
      %s57 = sphi 0, %s56
      %s71 = sphi 0, %s57
      %s75 = sphi 0, %s75
      %s77 = sphi 0, %s75
      %s78 = sphi 0, %s77
      %s92 = sphi 0, %s78
      %s96 = sphi 0, %s96
      %s98 = sphi 0, %s96
      %s99 = sphi 0, %s98
      %s113 = sphi 0, %s99
      %s117 = sphi 0, %s117
      %s119 = sphi 0, %s117
      %s120 = sphi 0, %s119
      %s134 = sphi 0, %s120
      %s138 = sphi 0, %s138
      %s140 = sphi 0, %s138
      %s141 = sphi 0, %s140
      %s155 = sphi 0, %s141
      %s159 = sphi 0, %s159
      %s161 = sphi 0, %s159
      %s162 = sphi 0, %s161
      %s176 = sphi 0, %s162
      %s182 = sphi 0, %s184
      %s185 = sphi 0, %s182
      %s186 = sphi 0, %s185
      %s202 = sphi 0, %s186
    $region4: #{tpu_custom_call.1} parent=1 // loop_header_branch
      %23 = sbr.rel (%p21) target = $region8
    $region5: #{tpu_custom_call.1} parent=1 // loop_body
      %s25 = ssub.s32 %s20, 1
      %s26 = ssub.s32 %s20, 2
      %s27 = sadd.s32 %s20, 1
      %s28 = ssub.s32 %s20, %s27
      %p29 = scmp.eq.s32.totalorder %s28, 0
      %s31 = sadd.s32 %s30, 1
      %s32 = scalar_select %p29, %s30, %s31
      %p35 = pneg %p29
      %p36 = scmp.eq.s32.totalorder %s20, 1
      %p37 = por %p35, %p36
      %p38 = scmp.ne.s32.totalorder %s30, %s33
      %p39 = scmp.eq.s32.totalorder %s20, 0
      %p40 = por %p38, %p39
      %p41 = scmp.ne.s32.totalorder %s30, %s33
      %p42 = scmp.eq.s32.totalorder %s25, 1
      %p43 = por %p41, %p42
      %p44 = scmp.ne.s32.totalorder %s33, %s34
      %p45 = scmp.eq.s32.totalorder %s25, 0
      %p46 = por %p44, %p45
      %p47 = scmp.ne.s32.totalorder %s33, %s34
      %p48 = scmp.eq.s32.totalorder %s26, 1
      %p49 = por %p47, %p48
      %p51 = scmp.ne.s32.totalorder %s34, %s50
      %p52 = scmp.eq.s32.totalorder %s26, 0
      %p53 = por %p51, %p52
      %s55 = sadd.s32 %s54, 1
      %p58 = scmp.eq.s32.totalorder %s20, 1
      %p59 = scmp.ne.s32.totalorder %s54, %s56
      %p60 = scmp.eq.s32.totalorder %s20, 0
      %p61 = por %p59, %p60
      %p62 = scmp.ne.s32.totalorder %s54, %s56
      %p63 = scmp.eq.s32.totalorder %s25, 1
      %p64 = por %p62, %p63
      %p65 = scmp.ne.s32.totalorder %s56, %s57
      %p66 = scmp.eq.s32.totalorder %s25, 0
      %p67 = por %p65, %p66
      %p68 = scmp.ne.s32.totalorder %s56, %s57
      %p69 = scmp.eq.s32.totalorder %s26, 1
      %p70 = por %p68, %p69
      %p72 = scmp.ne.s32.totalorder %s57, %s71
      %p73 = scmp.eq.s32.totalorder %s26, 0
      %p74 = por %p72, %p73
      %s76 = sadd.s32 %s75, 1
      %p79 = scmp.eq.s32.totalorder %s20, 1
      %p80 = scmp.ne.s32.totalorder %s75, %s77
      %p81 = scmp.eq.s32.totalorder %s20, 0
      %p82 = por %p80, %p81
      %p83 = scmp.ne.s32.totalorder %s75, %s77
      %p84 = scmp.eq.s32.totalorder %s25, 1
      %p85 = por %p83, %p84
      %p86 = scmp.ne.s32.totalorder %s77, %s78
      %p87 = scmp.eq.s32.totalorder %s25, 0
      %p88 = por %p86, %p87
      %p89 = scmp.ne.s32.totalorder %s77, %s78
      %p90 = scmp.eq.s32.totalorder %s26, 1
      %p91 = por %p89, %p90
      %p93 = scmp.ne.s32.totalorder %s78, %s92
      %p94 = scmp.eq.s32.totalorder %s26, 0
      %p95 = por %p93, %p94
      %s97 = sadd.s32 %s96, 1
      %p100 = scmp.eq.s32.totalorder %s20, 1
      %p101 = scmp.ne.s32.totalorder %s96, %s98
      %p102 = scmp.eq.s32.totalorder %s20, 0
      %p103 = por %p101, %p102
      %p104 = scmp.ne.s32.totalorder %s96, %s98
      %p105 = scmp.eq.s32.totalorder %s25, 1
      %p106 = por %p104, %p105
      %p107 = scmp.ne.s32.totalorder %s98, %s99
      %p108 = scmp.eq.s32.totalorder %s25, 0
      %p109 = por %p107, %p108
      %p110 = scmp.ne.s32.totalorder %s98, %s99
      %p111 = scmp.eq.s32.totalorder %s26, 1
      %p112 = por %p110, %p111
      %p114 = scmp.ne.s32.totalorder %s99, %s113
      %p115 = scmp.eq.s32.totalorder %s26, 0
      %p116 = por %p114, %p115
      %s118 = sadd.s32 %s117, 1
      %p121 = scmp.eq.s32.totalorder %s20, 1
      %p122 = scmp.ne.s32.totalorder %s117, %s119
      %p123 = scmp.eq.s32.totalorder %s20, 0
      %p124 = por %p122, %p123
      %p125 = scmp.ne.s32.totalorder %s117, %s119
      %p126 = scmp.eq.s32.totalorder %s25, 1
      %p127 = por %p125, %p126
      %p128 = scmp.ne.s32.totalorder %s119, %s120
      %p129 = scmp.eq.s32.totalorder %s25, 0
      %p130 = por %p128, %p129
      %p131 = scmp.ne.s32.totalorder %s119, %s120
      %p132 = scmp.eq.s32.totalorder %s26, 1
      %p133 = por %p131, %p132
      %p135 = scmp.ne.s32.totalorder %s120, %s134
      %p136 = scmp.eq.s32.totalorder %s26, 0
      %p137 = por %p135, %p136
      %s139 = sadd.s32 %s138, 1
      %p142 = scmp.eq.s32.totalorder %s20, 1
      %p143 = scmp.ne.s32.totalorder %s138, %s140
      %p144 = scmp.eq.s32.totalorder %s20, 0
      %p145 = por %p143, %p144
      %p146 = scmp.ne.s32.totalorder %s138, %s140
      %p147 = scmp.eq.s32.totalorder %s25, 1
      %p148 = por %p146, %p147
      %p149 = scmp.ne.s32.totalorder %s140, %s141
      %p150 = scmp.eq.s32.totalorder %s25, 0
      %p151 = por %p149, %p150
      %p152 = scmp.ne.s32.totalorder %s140, %s141
      %p153 = scmp.eq.s32.totalorder %s26, 1
      %p154 = por %p152, %p153
      %p156 = scmp.ne.s32.totalorder %s141, %s155
      %p157 = scmp.eq.s32.totalorder %s26, 0
      %p158 = por %p156, %p157
      %s160 = sadd.s32 %s159, 1
      %p163 = scmp.eq.s32.totalorder %s20, 1
      %p164 = scmp.ne.s32.totalorder %s159, %s161
      %p165 = scmp.eq.s32.totalorder %s20, 0
      %p166 = por %p164, %p165
      %p167 = scmp.ne.s32.totalorder %s159, %s161
      %p168 = scmp.eq.s32.totalorder %s25, 1
      %p169 = por %p167, %p168
      %p170 = scmp.ne.s32.totalorder %s161, %s162
      %p171 = scmp.eq.s32.totalorder %s25, 0
      %p172 = por %p170, %p171
      %p173 = scmp.ne.s32.totalorder %s161, %s162
      %p174 = scmp.eq.s32.totalorder %s26, 1
      %p175 = por %p173, %p174
      %p177 = scmp.ne.s32.totalorder %s162, %s176
      %p178 = scmp.eq.s32.totalorder %s26, 0
      %p179 = por %p177, %p178
      %s180 = ssub.s32 %s20, %s27
      %p181 = scmp.eq.s32.totalorder %s180, 0
      %s183 = sadd.s32 %s182, 1
      %s184 = scalar_select %p181, %s182, %s183
      %p187 = pneg %p181
      %p188 = scmp.eq.s32.totalorder %s20, 1
      %p189 = por %p187, %p188
      %p190 = scmp.ne.s32.totalorder %s182, %s185
      %p191 = scmp.eq.s32.totalorder %s20, 0
      %p192 = por %p190, %p191
      %p193 = scmp.ne.s32.totalorder %s182, %s185
      %p194 = scmp.eq.s32.totalorder %s25, 1
      %p195 = por %p193, %p194
      %p196 = scmp.ne.s32.totalorder %s185, %s186
      %p197 = scmp.eq.s32.totalorder %s25, 0
      %p198 = por %p196, %p197
      %p199 = scmp.ne.s32.totalorder %s185, %s186
      %p200 = scmp.eq.s32.totalorder %s26, 1
      %p201 = por %p199, %p200
      %p203 = scmp.ne.s32.totalorder %s186, %s202
      %p204 = scmp.eq.s32.totalorder %s26, 0
      %p205 = por %p203, %p204
      %p206 = scmp.le.s32.totalorder 1, %s20
      %p207 = scmp.lt.s32.totalorder %s20, 3
      %p208 = pnand %p206, %p207
      %p209 = pneg %p208
      // Predicated region
      $region9: #{tpu_custom_call.1} parent=5 // pred_check
        _
      $region10: #{tpu_custom_call.1} parent=5 // pred_check_branch
        %211 = sbr.rel (%p208) target = $region12
      $region11: #{tpu_custom_call.1} parent=5 // pred_region
        %s212 = ssub.s32 %s20, 1
        // Predicated region
        $region13: #{tpu_custom_call.1} parent=11 // pred_check
          %p213 = pneg %p67
        $region14: #{tpu_custom_call.1} parent=11 // pred_check_branch
          %215 = sbr.rel (%p213) target = $region16
        $region15: #{tpu_custom_call.1} parent=11 // pred_region
          %s217 = ssub.s32 3072, 3072
          %218 = vsyncadd [#allocation6], %s217
          %s219 = sshll.u32 [#allocation5], 4
          %s220 = int_to_ptr.vmem [resolvable:$true] %s219
          %225 = dma.hbm_to_vmem [thread:$0]  %s1, 3072, %s220, [#allocation6], 192, 192, 12
        $region16: #{tpu_custom_call.1} parent=11 // pred_fallthru
          _
        // Predicated region
        $region17: #{tpu_custom_call.1} parent=11 // pred_check
          %p226 = pneg %p88
        $region18: #{tpu_custom_call.1} parent=11 // pred_check_branch
          %228 = sbr.rel (%p226) target = $region20
        $region19: #{tpu_custom_call.1} parent=11 // pred_region
          _
        $region20: #{tpu_custom_call.1} parent=11 // pred_fallthru
          _
        // Predicated region
        $region21: #{tpu_custom_call.1} parent=11 // pred_check
          %p229 = pneg %p109
        $region22: #{tpu_custom_call.1} parent=11 // pred_check_branch
          %231 = sbr.rel (%p229) target = $region24
        $region23: #{tpu_custom_call.1} parent=11 // pred_region
          %s233 = ssub.s32 1024, 1024
          %234 = vsyncadd [#allocation6], %s233
          %s235 = sshll.u32 [#allocation7], 4
          %s236 = int_to_ptr.vmem [resolvable:$true] %s235
          %241 = dma.hbm_to_vmem [thread:$0]  %s3, 1024, %s236, [#allocation6], 64, 64, 4
        $region24: #{tpu_custom_call.1} parent=11 // pred_fallthru
          _
        // Predicated region
        $region25: #{tpu_custom_call.1} parent=11 // pred_check
          %p242 = pneg %p130
        $region26: #{tpu_custom_call.1} parent=11 // pred_check_branch
          %244 = sbr.rel (%p242) target = $region28
        $region27: #{tpu_custom_call.1} parent=11 // pred_region
          _
        $region28: #{tpu_custom_call.1} parent=11 // pred_fallthru
          _
        // Predicated region
        $region29: #{tpu_custom_call.1} parent=11 // pred_check
          %p245 = pneg %p151
        $region30: #{tpu_custom_call.1} parent=11 // pred_check_branch
          %247 = sbr.rel (%p245) target = $region32
        $region31: #{tpu_custom_call.1} parent=11 // pred_region
          _
        $region32: #{tpu_custom_call.1} parent=11 // pred_fallthru
          _
        // Predicated region
        $region33: #{tpu_custom_call.1} parent=11 // pred_check
          %p248 = pneg %p172
        $region34: #{tpu_custom_call.1} parent=11 // pred_check_branch
          %250 = sbr.rel (%p248) target = $region36
        $region35: #{tpu_custom_call.1} parent=11 // pred_region
          _
        $region36: #{tpu_custom_call.1} parent=11 // pred_fallthru
          _
      $region12: #{tpu_custom_call.1} parent=5 // pred_fallthru
        _
      %p251 = scmp.lt.s32.totalorder %s20, 2
      // Predicated region
      $region37: #{tpu_custom_call.1} parent=5 // pred_check
        %p252 = pneg %p251
      $region38: #{tpu_custom_call.1} parent=5 // pred_check_branch
        %254 = sbr.rel (%p252) target = $region40
      $region39: #{tpu_custom_call.1} parent=5 // pred_region
        // Predicated region
        $region41: #{tpu_custom_call.1} parent=39 // pred_check
          %p255 = pneg %p40
        $region42: #{tpu_custom_call.1} parent=39 // pred_check_branch
          %257 = sbr.rel (%p255) target = $region44
        $region43: #{tpu_custom_call.1} parent=39 // pred_region
          %s258 = sand.u32 %s30, 1
          %s259 = scalar_lea.sflag [#allocation3], %s258
          %s260 = sand.u32 %s30, 1
          %s261 = smul.addr %s260, 4
          %s262 = scalar_lea.vmem [#allocation2], %s261
          %s264 = ssub.s32 64, 64
          %265 = vsyncadd %s259, %s264
          %s266 = smul.addr %s20, 64
          %s267 = scalar_lea.hbm %s0, %s266
          %s269 = sshll.u32 %s262, 4
          %s270 = int_to_ptr.vmem [resolvable:$true] %s269
          %272 = dma.hbm_to_vmem [thread:$0]  %s267, 64, %s270, %s259
        $region44: #{tpu_custom_call.1} parent=39 // pred_fallthru
          _
      $region40: #{tpu_custom_call.1} parent=5 // pred_fallthru
        _
      %p273 = scmp.le.s32.totalorder 1, %s20
      %p274 = scmp.lt.s32.totalorder %s20, 3
      %p275 = pnand %p273, %p274
      %p276 = pneg %p275
      // Predicated region
      $region45: #{tpu_custom_call.1} parent=5 // pred_check
        _
      $region46: #{tpu_custom_call.1} parent=5 // pred_check_branch
        %278 = sbr.rel (%p275) target = $region48
      $region47: #{tpu_custom_call.1} parent=5 // pred_region
        %s279 = ssub.s32 %s20, 1
        %s280 = sand.u32 %s33, 1
        %s281 = scalar_lea.sflag [#allocation3], %s280
        %s282 = sand.u32 %s33, 1
        %s283 = smul.addr %s282, 4
        %s284 = scalar_lea.vmem [#allocation2], %s283
        // Predicated region
        $region49: #{tpu_custom_call.1} parent=47 // pred_check
          %p285 = pneg %p46
        $region50: #{tpu_custom_call.1} parent=47 // pred_check_branch
          %287 = sbr.rel (%p285) target = $region52
        $region51: #{tpu_custom_call.1} parent=47 // pred_region
          %288 = dma.done %s281, 64
        $region52: #{tpu_custom_call.1} parent=47 // pred_fallthru
          _
        // Predicated region
        $region53: #{tpu_custom_call.1} parent=47 // pred_check
          %p289 = pneg %p67
        $region54: #{tpu_custom_call.1} parent=47 // pred_check_branch
          %291 = sbr.rel (%p289) target = $region56
        $region55: #{tpu_custom_call.1} parent=47 // pred_region
          %292 = dma.done [#allocation6], 3072
        $region56: #{tpu_custom_call.1} parent=47 // pred_fallthru
          _
        // Predicated region
        $region57: #{tpu_custom_call.1} parent=47 // pred_check
          %p293 = pneg %p109
        $region58: #{tpu_custom_call.1} parent=47 // pred_check_branch
          %295 = sbr.rel (%p293) target = $region60
        $region59: #{tpu_custom_call.1} parent=47 // pred_region
          %296 = dma.done [#allocation6], 1024
        $region60: #{tpu_custom_call.1} parent=47 // pred_fallthru
          _
        %s297 = sand.u32 %s33, 1
        %s298 = scalar_lea.sflag [#allocation3], %s297
        %s299 = sand.u32 %s33, 1
        %s300 = smul.addr %s299, 4
        %s301 = scalar_lea.vmem [#allocation2], %s300
        %p302 = pneg %p46
        %p303 = pneg %p43
        %p304 = pneg %p67
        %p305 = pneg %p64
        %p306 = pneg %p88
        %p307 = pneg %p85
        %p308 = pneg %p109
        %p309 = pneg %p106
        %p310 = pneg %p130
        %p311 = pneg %p127
        %p312 = pneg %p151
        %p313 = pneg %p148
        %p314 = pneg %p172
        %p315 = pneg %p169
        %p316 = pneg %p198
        %p317 = pneg %p195
        %s318 = sand.u32 %s185, 1
        %s319 = scalar_lea.sflag [#allocation4], %s318
        %s320 = sand.u32 %s185, 1
        %s321 = smul.addr %s320, 4
        %s322 = scalar_lea.vmem [#allocation8], %s321
        %v324 = vld [vmem:[%s284] sm:$0xf]
        %v325 = vunpack.c.l.bf16 %v324
        %v326 = vld [vmem:[#allocation5] sm:$0xff]
        %v327 = vld [vmem:[#allocation5 + $0x8] sm:$0xf]
        %v328 = vld [vmem:[#allocation5 + $0xc] sm:$0xff]
        %v329 = vld [vmem:[#allocation5 + $0x14] sm:$0xf]
        %v330 = vld [vmem:[#allocation5 + $0x18] sm:$0xff]
        %v331 = vld [vmem:[#allocation5 + $0x20] sm:$0xf]
        %v332 = vld [vmem:[#allocation5 + $0x24] sm:$0xff]
        %v333 = vld [vmem:[#allocation5 + $0x2c] sm:$0xf]
        %v334 = vld [vmem:[#allocation5 + $0x30] sm:$0xff]
        %v335 = vld [vmem:[#allocation5 + $0x38] sm:$0xf]
        %v336 = vld [vmem:[#allocation5 + $0x3c] sm:$0xff]
        %v337 = vld [vmem:[#allocation5 + $0x44] sm:$0xf]
        %v338 = vld [vmem:[#allocation5 + $0x48] sm:$0xff]
        %v339 = vld [vmem:[#allocation5 + $0x50] sm:$0xf]
        %v340 = vld [vmem:[#allocation5 + $0x54] sm:$0xff]
        %v341 = vld [vmem:[#allocation5 + $0x5c] sm:$0xf]
        %v342 = vld [vmem:[#allocation5 + $0x60] sm:$0xff]
        %v343 = vld [vmem:[#allocation5 + $0x68] sm:$0xf]
        %v344 = vld [vmem:[#allocation5 + $0x6c] sm:$0xff]
        %v345 = vld [vmem:[#allocation5 + $0x74] sm:$0xf]
        %v346 = vld [vmem:[#allocation5 + $0x78] sm:$0xff]
        %v347 = vld [vmem:[#allocation5 + $0x80] sm:$0xf]
        %v348 = vld [vmem:[#allocation5 + $0x84] sm:$0xff]
        %v349 = vld [vmem:[#allocation5 + $0x8c] sm:$0xf]
        %v350 = vld [vmem:[#allocation5 + $0x90] sm:$0xff]
        %v351 = vld [vmem:[#allocation5 + $0x98] sm:$0xf]
        %v352 = vld [vmem:[#allocation5 + $0x9c] sm:$0xff]
        %v353 = vld [vmem:[#allocation5 + $0xa4] sm:$0xf]
        %v354 = vld [vmem:[#allocation5 + $0xa8] sm:$0xff]
        %v355 = vld [vmem:[#allocation5 + $0xb0] sm:$0xf]
        %v356 = vld [vmem:[#allocation5 + $0xb4] sm:$0xff]
        %v357 = vld [vmem:[#allocation5 + $0xbc] sm:$0xf]
        %v358 = vld [vmem:[%s2] sm:$0x7]
        %v360 = vlaneseq
        %v361 = vshrl.u32 %v360, 7
        %v362 = vsub.s32 0, %v361
        %v363 = vrot.slane %v358, %v362
        %v364 = vlaneseq
        %v365 = vshrl.u32 %v364, 7
        %v366 = vsub.s32 1, %v365
        %v367 = vrot.slane %v358, %v366
        %v368 = vlaneseq
        %v369 = vshrl.u32 %v368, 7
        %v370 = vsub.s32 2, %v369
        %v371 = vrot.slane %v358, %v370
        %v407 = vunpack.c.l.b16 %v326
        %v408 = vunpack.c.h.b16 %v326
        %v409 = vunpack.c.l.b16 %v327
        %v410 = vunpack.c.l.b16 %v328
        %v411 = vunpack.c.h.b16 %v328
        %v412 = vunpack.c.l.b16 %v329
        %v413 = vunpack.c.l.b16 %v330
        %v414 = vunpack.c.h.b16 %v330
        %v415 = vunpack.c.l.b16 %v331
        %v416 = vunpack.c.l.b16 %v332
        %v417 = vunpack.c.h.b16 %v332
        %v418 = vunpack.c.l.b16 %v333
        %v419 = vunpack.c.l.b16 %v334
        %v420 = vunpack.c.h.b16 %v334
        %v421 = vunpack.c.l.b16 %v335
        %v422 = vunpack.c.l.b16 %v336
        %v423 = vunpack.c.h.b16 %v336
        %v424 = vunpack.c.l.b16 %v337
        %v425 = vunpack.c.l.b16 %v338
        %v426 = vunpack.c.h.b16 %v338
        %v427 = vunpack.c.l.b16 %v339
        %v428 = vunpack.c.l.b16 %v340
        %v429 = vunpack.c.h.b16 %v340
        %v430 = vunpack.c.l.b16 %v341
        %v431 = vunpack.c.l.b16 %v342
        %v432 = vunpack.c.h.b16 %v342
        %v433 = vunpack.c.l.b16 %v343
        %v434 = vunpack.c.l.b16 %v344
        %v435 = vunpack.c.h.b16 %v344
        %v436 = vunpack.c.l.b16 %v345
        %v437 = vunpack.c.l.b16 %v346
        %v438 = vunpack.c.h.b16 %v346
        %v439 = vunpack.c.l.b16 %v347
        %v440 = vunpack.c.l.b16 %v348
        %v441 = vunpack.c.h.b16 %v348
        %v442 = vunpack.c.l.b16 %v349
        %v443 = vunpack.c.l.b16 %v350
        %v444 = vunpack.c.h.b16 %v350
        %v445 = vunpack.c.l.b16 %v351
        %v446 = vunpack.c.l.b16 %v352
        %v447 = vunpack.c.h.b16 %v352
        %v448 = vunpack.c.l.b16 %v353
        %v449 = vunpack.c.l.b16 %v354
        %v450 = vunpack.c.h.b16 %v354
        %v451 = vunpack.c.l.b16 %v355
        %v452 = vunpack.c.l.b16 %v356
        %v453 = vunpack.c.h.b16 %v356
        %v454 = vunpack.c.l.b16 %v357
        %v455 = vpack.c.b16 %v410, %v407
        %v456 = vpack.c.b16 %v411, %v408
        %v457 = vpack.c.b16 %v412, %v409
        %v458 = vpack.c.b16 %v416, %v413
        %v459 = vpack.c.b16 %v417, %v414
        %v460 = vpack.c.b16 %v418, %v415
        %v461 = vpack.c.b16 %v422, %v419
        %v462 = vpack.c.b16 %v423, %v420
        %v463 = vpack.c.b16 %v424, %v421
        %v464 = vpack.c.b16 %v428, %v425
        %v465 = vpack.c.b16 %v429, %v426
        %v466 = vpack.c.b16 %v430, %v427
        %v467 = vpack.c.b16 %v434, %v431
        %v468 = vpack.c.b16 %v435, %v432
        %v469 = vpack.c.b16 %v436, %v433
        %v470 = vpack.c.b16 %v440, %v437
        %v471 = vpack.c.b16 %v441, %v438
        %v472 = vpack.c.b16 %v442, %v439
        %v473 = vpack.c.b16 %v446, %v443
        %v474 = vpack.c.b16 %v447, %v444
        %v475 = vpack.c.b16 %v448, %v445
        %v476 = vpack.c.b16 %v452, %v449
        %v477 = vpack.c.b16 %v453, %v450
        %v478 = vpack.c.b16 %v454, %v451
        %503 = vmatprep.subr.bf16.mxu0 %v477
        %504 = vmatpush1.bf16.msra.mxu0 %v476
        %505 = vmatprep.subr.bf16.mxu0 %v474
        %506 = vmatpush1.bf16.msra.mxu0 %v473
        %507 = vmatprep.subr.bf16.mxu0 %v471
        %508 = vmatpush1.bf16.msra.mxu0 %v470
        %509 = vmatprep.subr.bf16.mxu0 %v468
        %510 = vmatpush1.bf16.msra.mxu0 %v467
        %511 = vmatprep.subr.bf16.mxu0 %v465
        %512 = vmatpush1.bf16.msra.mxu0 %v464
        %513 = vmatprep.subr.bf16.mxu0 %v462
        %514 = vmatpush1.bf16.msra.mxu0 %v461
        %515 = vmatprep.subr.bf16.mxu0 %v459
        %516 = vmatpush1.bf16.msra.mxu0 %v458
        %517 = vmatprep.subr.bf16.mxu0 %v456
        %518 = vmatpush1.bf16.msra.mxu0 %v455
        %519 = vmatprep.subr.bf16.mxu0 0
        %520 = vmatpush2.bf16.msra.mxu0 0
        %521 = vmatprep.subr.bf16.mxu0 0
        %522 = vmatpush2.bf16.msra.mxu0 0
        %523 = vmatprep.subr.bf16.mxu0 0
        %524 = vmatpush2.bf16.msra.mxu0 0
        %525 = vmatprep.subr.bf16.mxu0 0
        %526 = vmatpush2.bf16.msra.mxu0 0
        %527 = vmatprep.subr.bf16.mxu0 0
        %528 = vmatpush2.bf16.msra.mxu0 0
        %529 = vmatprep.subr.bf16.mxu0 0
        %530 = vmatpush2.bf16.msra.mxu0 0
        %531 = vmatprep.subr.bf16.mxu0 0
        %532 = vmatpush2.bf16.msra.mxu0 0
        %533 = vmatprep.subr.bf16.mxu0 0
        %534 = vmatpush2.bf16.msra.mxu0 0
        %535 = vmatprep.mubr.bf16.mxu0 0
        %536 = vmatmul.mubr.bf16.gmra.mxu0 %v324
        %v537 = vpop.f32.mrf.mxu0
        %v538 = vadd.f32 %v363, %v537
        %v539 = vpop.f32.mrf.mxu0
        %v540 = vadd.f32 %v367, %v539
        %v541 = vpop.f32.mrf.mxu0
        %v542 = vpop.f32.mrf.mxu0
        %543 = vdwg.mxu0
        %544 = vmatprep.subr.bf16.mxu0 0
        %545 = vmatpush1.bf16.msra.mxu0 %v478
        %546 = vmatprep.subr.bf16.mxu0 0
        %547 = vmatpush1.bf16.msra.mxu0 %v475
        %548 = vmatprep.subr.bf16.mxu0 0
        %549 = vmatpush1.bf16.msra.mxu0 %v472
        %550 = vmatprep.subr.bf16.mxu0 0
        %551 = vmatpush1.bf16.msra.mxu0 %v469
        %552 = vmatprep.subr.bf16.mxu0 0
        %553 = vmatpush1.bf16.msra.mxu0 %v466
        %554 = vmatprep.subr.bf16.mxu0 0
        %555 = vmatpush1.bf16.msra.mxu0 %v463
        %556 = vmatprep.subr.bf16.mxu0 0
        %557 = vmatpush1.bf16.msra.mxu0 %v460
        %558 = vmatprep.subr.bf16.mxu0 0
        %559 = vmatpush1.bf16.msra.mxu0 %v457
        %560 = vmatprep.subr.bf16.mxu0 0
        %561 = vmatpush2.bf16.msra.mxu0 0
        %562 = vmatprep.subr.bf16.mxu0 0
        %563 = vmatpush2.bf16.msra.mxu0 0
        %564 = vmatprep.subr.bf16.mxu0 0
        %565 = vmatpush2.bf16.msra.mxu0 0
        %566 = vmatprep.subr.bf16.mxu0 0
        %567 = vmatpush2.bf16.msra.mxu0 0
        %568 = vmatprep.subr.bf16.mxu0 0
        %569 = vmatpush2.bf16.msra.mxu0 0
        %570 = vmatprep.subr.bf16.mxu0 0
        %571 = vmatpush2.bf16.msra.mxu0 0
        %572 = vmatprep.subr.bf16.mxu0 0
        %573 = vmatpush2.bf16.msra.mxu0 0
        %574 = vmatprep.subr.bf16.mxu0 0
        %575 = vmatpush2.bf16.msra.mxu0 0
        %576 = vmatprep.mubr.bf16.mxu0 0
        %577 = vmatmul.mubr.bf16.gmra.mxu0 %v324
        %v578 = vpop.f32.mrf.mxu0
        %v579 = vadd.f32 %v371, %v578
        %v580 = vpop.f32.mrf.mxu0
        %v581 = vpop.f32.mrf.mxu0
        %v582 = vpop.f32.mrf.mxu0
        %583 = vdwg.mxu0
        %v584 = vpack.c.bf16 %v538, %v538
        %v585 = vpack.c.bf16 %v540, %v540
        %v586 = vpack.c.bf16 %v579, %v579
        %587 = vmatprep.subr.bf16.mxu0 0
        %588 = vmatpush1.bf16.xpose.msra.mxu0 0
        %589 = vmatprep.subr.bf16.mxu0 0
        %590 = vmatpush1.bf16.xpose.msra.mxu0 0
        %591 = vmatprep.subr.bf16.mxu0 0
        %592 = vmatpush1.bf16.xpose.msra.mxu0 0
        %593 = vmatprep.subr.bf16.mxu0 0
        %594 = vmatpush1.bf16.xpose.msra.mxu0 0
        %595 = vmatprep.subr.bf16.mxu0 0
        %596 = vmatpush1.bf16.xpose.msra.mxu0 0
        %597 = vmatprep.subr.bf16.mxu0 0
        %598 = vmatpush1.bf16.xpose.msra.mxu0 0
        %599 = vmatprep.subr.bf16.mxu0 0
        %600 = vmatpush1.bf16.xpose.msra.mxu0 0
        %601 = vmatprep.subr.bf16.mxu0 0
        %602 = vmatpush1.bf16.xpose.msra.mxu0 %v585
        %603 = vmatprep.subr.bf16.mxu0 0
        %604 = vmatpush2.bf16.xpose.msra.mxu0 0
        %605 = vmatprep.subr.bf16.mxu0 0
        %606 = vmatpush2.bf16.xpose.msra.mxu0 0
        %607 = vmatprep.subr.bf16.mxu0 0
        %608 = vmatpush2.bf16.xpose.msra.mxu0 0
        %609 = vmatprep.subr.bf16.mxu0 0
        %610 = vmatpush2.bf16.xpose.msra.mxu0 0
        %611 = vmatprep.subr.bf16.mxu0 0
        %612 = vmatpush2.bf16.xpose.msra.mxu0 0
        %613 = vmatprep.subr.bf16.mxu0 0
        %614 = vmatpush2.bf16.xpose.msra.mxu0 0
        %615 = vmatprep.subr.bf16.mxu0 0
        %616 = vmatpush2.bf16.xpose.msra.mxu0 0
        %617 = vmatprep.subr.bf16.mxu0 0
        %618 = vmatpush2.bf16.xpose.msra.mxu0 0
        %619 = vmatprep.mubr.bf16.mxu0 0
        %620 = vmatmul.mubr.bf16.gmra.mxu0 %v584
        %v621 = vpop.f32.mrf.mxu0
        %v622 = vadd.f32 0.0, %v621
        %v623 = vpop.f32.mrf.mxu0
        %v624 = vpop.f32.mrf.mxu0
        %v625 = vpop.f32.mrf.mxu0
        %626 = vdwg.mxu0
        %vm627 = vcmask 64512
        %v628 = vsel %vm627, %v622, -inf
        %629 = vmax.xlane.f32.xlu0 %v628
        %v630 = vpop.xlane.xlu0 %629
        %v631 = vsub.f32 %v622, %v630
        %v632 = vmul.f32 %v631, 1.442695
        %v633 = vpow.pop %v632
        %v634 = vsel %vm627, %v633, 0.0
        %635 = vadd.xlane.f32.xlu0 %v634
        %v636 = vpop.xlane.xlu0 %635
        %v637 = vrcp.pop %v636
        %v638 = vmul.f32 %v633, %v637
        %v639 = vpack.c.bf16 %v638, %v638
        %v641 = vsel %vm627, %v639, 0
        %vm643 = vcmask 1043456
        %v645 = vsel %vm643, %v586, 0
        %647 = vmatprep.subr.bf16.mxu0 0
        %648 = vmatpush1.bf16.msra.mxu0 0
        %649 = vmatprep.subr.bf16.mxu0 0
        %650 = vmatpush1.bf16.msra.mxu0 0
        %651 = vmatprep.subr.bf16.mxu0 0
        %652 = vmatpush1.bf16.msra.mxu0 0
        %653 = vmatprep.subr.bf16.mxu0 0
        %654 = vmatpush1.bf16.msra.mxu0 0
        %655 = vmatprep.subr.bf16.mxu0 0
        %656 = vmatpush1.bf16.msra.mxu0 0
        %657 = vmatprep.subr.bf16.mxu0 0
        %658 = vmatpush1.bf16.msra.mxu0 0
        %659 = vmatprep.subr.bf16.mxu0 0
        %660 = vmatpush1.bf16.msra.mxu0 0
        %661 = vmatprep.subr.bf16.mxu0 0
        %662 = vmatpush1.bf16.msra.mxu0 %v645
        %663 = vmatprep.subr.bf16.mxu0 0
        %664 = vmatpush2.bf16.msra.mxu0 0
        %665 = vmatprep.subr.bf16.mxu0 0
        %666 = vmatpush2.bf16.msra.mxu0 0
        %667 = vmatprep.subr.bf16.mxu0 0
        %668 = vmatpush2.bf16.msra.mxu0 0
        %669 = vmatprep.subr.bf16.mxu0 0
        %670 = vmatpush2.bf16.msra.mxu0 0
        %671 = vmatprep.subr.bf16.mxu0 0
        %672 = vmatpush2.bf16.msra.mxu0 0
        %673 = vmatprep.subr.bf16.mxu0 0
        %674 = vmatpush2.bf16.msra.mxu0 0
        %675 = vmatprep.subr.bf16.mxu0 0
        %676 = vmatpush2.bf16.msra.mxu0 0
        %677 = vmatprep.subr.bf16.mxu0 0
        %678 = vmatpush2.bf16.msra.mxu0 0
        %679 = vmatprep.mubr.bf16.mxu0 0
        %680 = vmatmul.mubr.bf16.gmra.mxu0 %v641
        %v681 = vpop.f32.mrf.mxu0
        %v682 = vadd.f32 0.0, %v681
        %v683 = vpop.f32.mrf.mxu0
        %v684 = vpop.f32.mrf.mxu0
        %v685 = vpop.f32.mrf.mxu0
        %686 = vdwg.mxu0
        %v687 = vpack.c.bf16 %v682, %v682
        %v688 = vld [vmem:[#allocation7] sm:$0xf]
        %v689 = vld [vmem:[#allocation7 + $0x4] sm:$0xf]
        %v690 = vld [vmem:[#allocation7 + $0x8] sm:$0xf]
        %v691 = vld [vmem:[#allocation7 + $0xc] sm:$0xf]
        %v692 = vld [vmem:[#allocation7 + $0x10] sm:$0xf]
        %v693 = vld [vmem:[#allocation7 + $0x14] sm:$0xf]
        %v694 = vld [vmem:[#allocation7 + $0x18] sm:$0xf]
        %v695 = vld [vmem:[#allocation7 + $0x1c] sm:$0xf]
        %v696 = vld [vmem:[#allocation7 + $0x20] sm:$0xf]
        %v697 = vld [vmem:[#allocation7 + $0x24] sm:$0xf]
        %v698 = vld [vmem:[#allocation7 + $0x28] sm:$0xf]
        %v699 = vld [vmem:[#allocation7 + $0x2c] sm:$0xf]
        %v700 = vld [vmem:[#allocation7 + $0x30] sm:$0xf]
        %v701 = vld [vmem:[#allocation7 + $0x34] sm:$0xf]
        %v702 = vld [vmem:[#allocation7 + $0x38] sm:$0xf]
        %v703 = vld [vmem:[#allocation7 + $0x3c] sm:$0xf]
        %v704 = vld [vmem:[%s4] sm:$0x1]
        %v706 = vlaneseq
        %v707 = vshrl.u32 %v706, 7
        %v708 = vsub.s32 0, %v707
        %v709 = vrot.slane %v704, %v708
        %v727 = vunpack.c.l.b16 %v688
        %v728 = vunpack.c.l.b16 %v689
        %v729 = vunpack.c.l.b16 %v690
        %v730 = vunpack.c.l.b16 %v691
        %v731 = vunpack.c.l.b16 %v692
        %v732 = vunpack.c.l.b16 %v693
        %v733 = vunpack.c.l.b16 %v694
        %v734 = vunpack.c.l.b16 %v695
        %v735 = vunpack.c.l.b16 %v696
        %v736 = vunpack.c.l.b16 %v697
        %v737 = vunpack.c.l.b16 %v698
        %v738 = vunpack.c.l.b16 %v699
        %v739 = vunpack.c.l.b16 %v700
        %v740 = vunpack.c.l.b16 %v701
        %v741 = vunpack.c.l.b16 %v702
        %v742 = vunpack.c.l.b16 %v703
        %v743 = vpack.c.b16 %v728, %v727
        %v744 = vpack.c.b16 %v730, %v729
        %v745 = vpack.c.b16 %v732, %v731
        %v746 = vpack.c.b16 %v734, %v733
        %v747 = vpack.c.b16 %v736, %v735
        %v748 = vpack.c.b16 %v738, %v737
        %v749 = vpack.c.b16 %v740, %v739
        %v750 = vpack.c.b16 %v742, %v741
        %759 = vmatprep.subr.bf16.mxu0 0
        %760 = vmatpush1.bf16.msra.mxu0 %v750
        %761 = vmatprep.subr.bf16.mxu0 0
        %762 = vmatpush1.bf16.msra.mxu0 %v749
        %763 = vmatprep.subr.bf16.mxu0 0
        %764 = vmatpush1.bf16.msra.mxu0 %v748
        %765 = vmatprep.subr.bf16.mxu0 0
        %766 = vmatpush1.bf16.msra.mxu0 %v747
        %767 = vmatprep.subr.bf16.mxu0 0
        %768 = vmatpush1.bf16.msra.mxu0 %v746
        %769 = vmatprep.subr.bf16.mxu0 0
        %770 = vmatpush1.bf16.msra.mxu0 %v745
        %771 = vmatprep.subr.bf16.mxu0 0
        %772 = vmatpush1.bf16.msra.mxu0 %v744
        %773 = vmatprep.subr.bf16.mxu0 0
        %774 = vmatpush1.bf16.msra.mxu0 %v743
        %775 = vmatprep.subr.bf16.mxu0 0
        %776 = vmatpush2.bf16.msra.mxu0 0
        %777 = vmatprep.subr.bf16.mxu0 0
        %778 = vmatpush2.bf16.msra.mxu0 0
        %779 = vmatprep.subr.bf16.mxu0 0
        %780 = vmatpush2.bf16.msra.mxu0 0
        %781 = vmatprep.subr.bf16.mxu0 0
        %782 = vmatpush2.bf16.msra.mxu0 0
        %783 = vmatprep.subr.bf16.mxu0 0
        %784 = vmatpush2.bf16.msra.mxu0 0
        %785 = vmatprep.subr.bf16.mxu0 0
        %786 = vmatpush2.bf16.msra.mxu0 0
        %787 = vmatprep.subr.bf16.mxu0 0
        %788 = vmatpush2.bf16.msra.mxu0 0
        %789 = vmatprep.subr.bf16.mxu0 0
        %790 = vmatpush2.bf16.msra.mxu0 0
        %791 = vmatprep.mubr.bf16.mxu0 0
        %792 = vmatmul.mubr.bf16.gmra.mxu0 %v687
        %v793 = vpop.f32.mrf.mxu0
        %v794 = vadd.f32 %v709, %v793
        %v795 = vpop.f32.mrf.mxu0
        %v796 = vpop.f32.mrf.mxu0
        %v797 = vpop.f32.mrf.mxu0
        %798 = vdwg.mxu0
        %v799 = vadd.f32 %v794, %v325
        %800 = vadd.xlane.f32.xlu0 %v799
        %v801 = vpop.xlane.xlu0 %800
        %v802 = vmul.f32 %v801, 0.03125
        %v803 = vsub.f32 %v799, %v802
        %v804 = vmul.f32 %v803, %v803
        %805 = vadd.xlane.f32.xlu0 %v804
        %v806 = vpop.xlane.xlu0 %805
        %v807 = vmul.f32 %v802, 96.0
        %v808 = vmul.f32 %v807, %v802
        %v809 = vsub.f32 %v806, %v808
        %v810 = vmul.f32 %v809, 0.03125
        %v811 = vadd.f32 %v810, 1e-05
        %v812 = vrsqrt.pop %v811
        %v813 = vmul.f32 %v803, %v812
        %v814 = vld [vmem:[%s5] sm:$0x1]
        %v816 = vlaneseq
        %v817 = vshrl.u32 %v816, 7
        %v818 = vsub.s32 0, %v817
        %v819 = vrot.slane %v814, %v818
        %v821 = vmul.f32 %v813, %v819
        %v822 = vld [vmem:[%s6] sm:$0x1]
        %v824 = vlaneseq
        %v825 = vshrl.u32 %v824, 7
        %v826 = vsub.s32 0, %v825
        %v827 = vrot.slane %v822, %v826
        %v829 = vadd.f32 %v821, %v827
        %v830 = vpack.c.bf16 %v829, %v829
        %831 = vst [vmem:[%s322] sm:$0xf] %v830
        %s832 = sand.u32 %s185, 1
        %s833 = scalar_lea.sflag [#allocation4], %s832
        %s834 = sand.u32 %s185, 1
        %s835 = smul.addr %s834, 4
        %s836 = scalar_lea.vmem [#allocation8], %s835
        // Predicated region
        $region61: #{tpu_custom_call.1} parent=47 // pred_check
          %p837 = pneg %p195
        $region62: #{tpu_custom_call.1} parent=47 // pred_check_branch
          %839 = sbr.rel (%p837) target = $region64
        $region63: #{tpu_custom_call.1} parent=47 // pred_region
          %s841 = ssub.s32 64, 64
          %842 = vsyncadd %s833, %s841
          %s843 = smul.addr %s25, 64
          %s844 = scalar_lea.hbm %s7, %s843
          %s846 = sshll.u32 %s836, 4
          %s847 = int_to_ptr.vmem [resolvable:$true] %s846
          %849 = dma.vmem_to_hbm [thread:$0]  %s847, 64, %s844, %s833
        $region64: #{tpu_custom_call.1} parent=47 // pred_fallthru
          _
      $region48: #{tpu_custom_call.1} parent=5 // pred_fallthru
        _
      %p850 = scmp.le.s32.totalorder 2, %s20
      // Predicated region
      $region65: #{tpu_custom_call.1} parent=5 // pred_check
        %p851 = pneg %p850
      $region66: #{tpu_custom_call.1} parent=5 // pred_check_branch
        %853 = sbr.rel (%p851) target = $region68
      $region67: #{tpu_custom_call.1} parent=5 // pred_region
        %s854 = ssub.s32 %s20, 2
        // Predicated region
        $region69: #{tpu_custom_call.1} parent=67 // pred_check
          %p855 = pneg %p201
        $region70: #{tpu_custom_call.1} parent=67 // pred_check_branch
          %857 = sbr.rel (%p855) target = $region72
        $region71: #{tpu_custom_call.1} parent=67 // pred_region
          %s858 = sand.u32 %s186, 1
          %s859 = scalar_lea.sflag [#allocation4], %s858
          %s860 = sand.u32 %s186, 1
          %s861 = smul.addr %s860, 4
          %s862 = scalar_lea.vmem [#allocation8], %s861
          %863 = dma.done %s859, 64
        $region72: #{tpu_custom_call.1} parent=67 // pred_fallthru
          _
      $region68: #{tpu_custom_call.1} parent=5 // pred_fallthru
        _
    $region6: #{tpu_custom_call.1} parent=1 // loop_footer
      %s24 = sadd.s32 1, %s20
    $region7: #{tpu_custom_call.1} parent=1 // loop_footer_branch
      %19 = sbr.rel target = $region3
    $region8: #{tpu_custom_call.1} parent=1 // loop_exit
      _
    %864 = vsyncpa [#allocation3], 1
    %s865 = scalar_lea.sflag [#allocation3], 1
    %866 = vsyncpa %s865, 1
    %867 = vsyncpa [#allocation6], 1
    %868 = vsyncpa [#allocation4], 1
    %s869 = scalar_lea.sflag [#allocation4], 1
    %870 = vsyncpa %s869, 1

</llo_original>
